<compile_context>
chip_gen: v5e
topology: v5e:2x2
jax: 0.10.0
libtpu: 0.0.40
codegen_flags: <defaults>
</compile_context>

<pallas_src>
import numpy as np
import jax
import jax.numpy as jnp
from jax.experimental import pallas as pl
from jax.experimental.pallas import tpu as pltpu

KSIZE = 3
PAD = 1
SENT = np.iinfo(np.int32).max
ROW_ALIGN = 256                      # row-count padding granularity
_W_BLOCK_BUDGET = 8 * 1024 * 1024    # max bf16 bytes per resident weight block
_G_BLOCK_BUDGET = 8 * 1024 * 1024    # max bf16 bytes per G row-tile block
_COUT_TILE = 512                     # column tile for very wide outputs (v7x)
_VMEM_LIMIT = 64 * 1024 * 1024       # explicit scoped-VMEM limit (<= v7x physical)

_OFFS = np.array([[kz, ky, kx] for kz in range(KSIZE)
                  for ky in range(KSIZE)
                  for kx in range(KSIZE)], dtype=np.int32)      # [27, 3]
OFFS = jnp.asarray(_OFFS)


def _round_up(n, m):
    return ((n + m - 1) // m) * m


# ----------------------------------------------------------------------------
# Pallas kernels
# ----------------------------------------------------------------------------
def _spconv_matmul_kernel(g_ref, w_ref, scale_ref, shift_ref, v_ref, o_ref,
                          acc_ref):
    """out[tile] = relu((sum_k G @ W) * scale + shift) * row_valid, bf16."""
    k = pl.program_id(2)

    @pl.when(k == 0)
    def _():
        acc_ref[...] = jnp.zeros_like(acc_ref)

    acc_ref[...] += jnp.dot(g_ref[...], w_ref[...],
                            preferred_element_type=jnp.float32)

    @pl.when(k == pl.num_programs(2) - 1)
    def _():
        y = jnp.maximum(acc_ref[...] * scale_ref[...] + shift_ref[...], 0.0)
        o_ref[...] = (y * v_ref[...]).astype(o_ref.dtype)


def _choose_kg(kcin, tc):
    """Smallest K split whose bf16 weight block (gcin x tc) fits the budget."""
    for kg in (1, 3, 9, 27):
        if kcin % kg:
            continue
        gcin = kcin // kg
        if kg > 1 and gcin % 128:
            continue                       # K chunks must stay lane-aligned
        if gcin * tc * 2 <= _W_BLOCK_BUDGET:
            return kg
    return 1                               # safe fallback (may be large)


def spconv_matmul(G2, W2, scale, shift, vmask):
    """G2: [Npad, K] bf16.  W2: [K, Cout] bf16.  vmask: [Npad, 1] f32.

    Returns [Npad, Cout] bf16 = relu((G2 @ W2) * scale + shift) * vmask.
    """
    npad, kcin = G2.shape
    cout = W2.shape[-1]
    tc = _COUT_TILE if cout > _COUT_TILE else cout
    kg = _choose_kg(kcin, tc)
    gcin = kcin // kg
    # Row tile chosen AFTER kg, budgeted against the chunked K width.
    tn = 512 if (npad % 512 == 0 and gcin * 512 * 2 <= _G_BLOCK_BUDGET) else 256
    grid = (npad // tn, cout // tc, kg)

    flops = 2 * npad * kcin * cout
    bytes_accessed = (G2.size * 2 * (cout // tc)
                      + W2.size * 2 * max(1, npad // tn if kg > 1 else 1)
                      + npad * cout * 2)

    return pl.pallas_call(
        _spconv_matmul_kernel,
        out_shape=jax.ShapeDtypeStruct((npad, cout), jnp.bfloat16),
        grid=grid,
        in_specs=[
            pl.BlockSpec((tn, gcin), lambda i, j, k: (i, k)),
            pl.BlockSpec((gcin, tc), lambda i, j, k: (k, j)),
            pl.BlockSpec((1, tc), lambda i, j, k: (0, j)),
            pl.BlockSpec((1, tc), lambda i, j, k: (0, j)),
            pl.BlockSpec((tn, 1), lambda i, j, k: (i, 0)),
        ],
        out_specs=pl.BlockSpec((tn, tc), lambda i, j, k: (i, j)),
        scratch_shapes=[pltpu.VMEM((tn, tc), jnp.float32)],
        compiler_params=pltpu.CompilerParams(
            dimension_semantics=("parallel", "parallel", "arbitrary"),
            vmem_limit_bytes=_VMEM_LIMIT),
        cost_estimate=pl.CostEstimate(flops=flops, transcendentals=0,
                                      bytes_accessed=bytes_accessed),
    )(G2, W2, scale, shift, vmask)


def pool_mlp_head(feats, mask, params):
    """Global sparse max-pool (per-batch loop, no [B,N,C] broadcast) + MLP."""
    (w1, b1), (w2, b2), (w3, b3) = params
    bsz = mask.shape[0]
    ncls = w3.shape[-1]

    def kernel(f_ref, m_ref, w1_ref, b1_ref, w2_ref, b2_ref, w3_ref, b3_ref,
               o_ref):
        f = f_ref[...].astype(jnp.float32)                  # [N, C]
        rows = []
        for b in range(bsz):                                # static unroll, small B
            mb = m_ref[b, :] > 0.5                          # [N]
            # Features are post-ReLU (>= 0): masked-to-0 max == sparse max,
            # and an empty batch pools to 0 (matches .dense() of no sites).
            rows.append(jnp.max(jnp.where(mb[:, None], f, 0.0), axis=0))
        x = jnp.stack(rows, axis=0).astype(jnp.bfloat16)    # [B, C]
        h = jnp.dot(x, w1_ref[...], preferred_element_type=jnp.float32) + b1_ref[...]
        h = jnp.maximum(h, 0.0).astype(jnp.bfloat16)
        h = jnp.dot(h, w2_ref[...], preferred_element_type=jnp.float32) + b2_ref[...]
        h = jnp.maximum(h, 0.0).astype(jnp.bfloat16)
        o_ref[...] = jnp.dot(h, w3_ref[...],
                             preferred_element_type=jnp.float32) + b3_ref[...]

    def full(a):
        return pl.BlockSpec(a.shape, lambda i, nd=a.ndim: (0,) * nd)

    return pl.pallas_call(
        kernel,
        out_shape=jax.ShapeDtypeStruct((bsz, ncls), jnp.float32),
        grid=(1,),
        in_specs=[full(feats), full(mask), full(w1), full(b1),
                  full(w2), full(b2), full(w3), full(b3)],
        out_specs=pl.BlockSpec((bsz, ncls), lambda i: (0, 0)),
        compiler_params=pltpu.CompilerParams(vmem_limit_bytes=_VMEM_LIMIT),
    )(feats, mask, w1, b1, w2, b2, w3, b3)


# ----------------------------------------------------------------------------
# Sparse-conv glue (rulebook / gather) in plain JAX
# ----------------------------------------------------------------------------
def _encode(b, zyx, shape):
    D, H, W = shape
    return ((b * D + zyx[..., 0]) * H + zyx[..., 1]) * W + zyx[..., 2]


def _lookup(in_coords, in_valid, qb, qzyx, qok, in_shape):
    """Row index of each query voxel; missing queries map to the last (zero) row."""
    nin = in_coords.shape[0]
    in_keys = jnp.where(in_valid,
                        _encode(in_coords[:, 0], in_coords[:, 1:4], in_shape),
                        -2 - jnp.arange(nin, dtype=jnp.int32))
    order = jnp.argsort(in_keys)
    skeys = in_keys[order]
    qkeys = jnp.where(qok, _encode(qb, qzyx, in_shape), -1)
    pos = jnp.clip(jnp.searchsorted(skeys, qkeys), 0, nin - 1)
    found = skeys[pos] == qkeys
    # Last input row is guaranteed invalid and zeroed by the conv epilogue,
    # so no extra [Nout, 27, Cin] mask-multiply pass is needed after the gather.
    return jnp.where(found, order[pos], nin - 1)


def _candidate_keys(coords, valid, stride, in_shape, out_shape):
    numer = coords[:, None, 1:4] + PAD - OFFS[None]          # [Nin, 27, 3]
    o = numer // stride
    ok = (valid[:, None]
          & jnp.all(numer % stride == 0, axis=-1)
          & jnp.all(o >= 0, axis=-1)
          & jnp.all(o < jnp.asarray(out_shape, jnp.int32), axis=-1))
    return jnp.where(ok, _encode(coords[:, 0:1], o, out_shape), SENT)


def _downsample_sites(coords, valid, stride, in_shape):
    """Active output sites of a stride-s sparse conv, with a tight data-derived cap."""
    out_shape = tuple((d + 2 * PAD - KSIZE) // stride + 1 for d in in_shape)
    keys = _candidate_keys(coords, valid, stride, in_shape, out_shape)
    flat = keys.ravel()
    # TODO(synk): data-derived active-site count forces a host sync per layer
    # (forward is eager); under jit a static per-layer cap would be needed.
    skeys = jnp.sort(flat)
    is_new = jnp.concatenate([jnp.array([True]), skeys[1:] != skeys[:-1]])
    n_active = int(jnp.sum(jnp.where(skeys != SENT, is_new, False)))
    out_cap = _round_up(n_active + 1, ROW_ALIGN)   # +1 keeps the last row invalid

    ukeys = jnp.unique(flat, size=out_cap, fill_value=SENT)
    out_valid = ukeys != SENT
    kk = jnp.where(out_valid, ukeys, 0)
    Do, Ho, Wo = out_shape
    vol = Do * Ho * Wo
    b = kk // vol
    r = kk % vol
    z = r // (Ho * Wo)
    y = (r % (Ho * Wo)) // Wo
    x = r % Wo
    out_coords = jnp.stack([b, z, y, x], axis=-1).astype(jnp.int32)
    return out_coords, out_valid, out_shape


def sparse_conv_layer(in_coords, in_valid, in_feats, out_coords, out_valid,
                      params, stride, in_shape):
    W2, scale, shift = params
    # Gather: for output site o and kernel offset k, input site is o*s - p + k.
    nb = out_coords[:, None, 1:4] * stride - PAD + OFFS[None]    # [Nout, 27, 3]
    nb_ok = (out_valid[:, None]
             & jnp.all(nb >= 0, axis=-1)
             & jnp.all(nb < jnp.asarray(in_shape, jnp.int32), axis=-1))
    idx = _lookup(in_coords, in_valid, out_coords[:, 0:1], nb, nb_ok, in_shape)
    feats = in_feats if in_feats.dtype == jnp.bfloat16 else in_feats.astype(jnp.bfloat16)
    gath = feats[idx]                                            # [Nout, 27, Cin]
    G2 = gath.reshape(gath.shape[0], KSIZE ** 3 * feats.shape[1])
    vmask = out_valid.astype(jnp.float32)[:, None]
    return spconv_matmul(G2, W2, scale, shift, vmask)            # bf16, masked


def sparse_pointwise_layer(valid, feats, params):
    W2, scale, shift = params            # W2: [Cin, Cout]
    vmask = valid.astype(jnp.float32)[:, None]
    return spconv_matmul(feats.astype(jnp.bfloat16), W2, scale, shift, vmask)


# ----------------------------------------------------------------------------
# Parameter init (deterministic, synthetic)
# ----------------------------------------------------------------------------
def _bn_fold(key, cout, bias=None, eps=1e-5):
    # TODO(synk): BatchNorm1d folded in eval mode (running stats); training-mode
    # batch statistics are not reproduced.
    k1, k2, k3 = jax.random.split(key, 3)
    gamma = 1.0 + 0.1 * jax.random.normal(k1, (cout,), jnp.float32)
    beta = 0.1 * jax.random.normal(k2, (cout,), jnp.float32)
    mean = 0.05 * jax.random.normal(k3, (cout,), jnp.float32)
    var = jnp.ones((cout,), jnp.float32)
    scale = gamma / jnp.sqrt(var + eps)
    shift = beta - mean * scale
    if bias is not None:
        shift = shift + bias * scale
    return scale.reshape(1, cout), shift.reshape(1, cout)


def init_conv_params(key, kvol, cin, cout, with_bias=False):
    kw, kb, kbn = jax.random.split(key, 3)
    W = jax.random.normal(kw, (kvol * cin, cout), jnp.float32) / np.sqrt(kvol * cin)
    bias = 0.1 * jax.random.normal(kb, (cout,), jnp.float32) if with_bias else None
    scale, shift = _bn_fold(kbn, cout, bias)
    return W.astype(jnp.bfloat16), scale, shift


def init_linear(key, cin, cout):
    kw, kb = jax.random.split(key)
    w = jax.random.normal(kw, (cin, cout), jnp.float32) / np.sqrt(cin)
    b = 0.1 * jax.random.normal(kb, (1, cout), jnp.float32)
    return w.astype(jnp.bfloat16), b


def build_network_params(key):
    channels = (32, 48, 64, 96, 128)
    emb = 1024
    ks = jax.random.split(key, 12)
    params = {}
    # TODO(synk): `sparse_linear` source not provided; assumed per-point
    # Linear(3, 32) + BatchNorm1d (folded) + ReLU, i.e. a kernel-size-1 conv.
    params["mlp1"] = init_conv_params(ks[0], 1, 3, channels[0], with_bias=True)
    conv_defs = [
        (channels[0], channels[1], 1),
        (channels[1], channels[2], 2),
        (channels[2], channels[3], 2),
        (channels[3], channels[4], 2),
        (channels[4], emb // 4, 2),
        (emb // 4, emb // 2, 2),
        (emb // 2, emb, 2),
    ]
    params["convs"] = [(init_conv_params(ks[1 + i], KSIZE ** 3, ci, co), s)
                       for i, (ci, co, s) in enumerate(conv_defs)]
    params["mlp"] = [init_linear(ks[8], emb, 512),
                     init_linear(ks[9], 512, 512),
                     init_linear(ks[10], 512, 30)]
    return params


# ----------------------------------------------------------------------------
# Network forward (mirrors the PyTorch Network.forward)
# ----------------------------------------------------------------------------
def network_forward(sparse_dict, params):
    coords = sparse_dict["indices"]        # [N, 4] int32 (b, z, y, x)
    feats = sparse_dict["features"]        # [N, 3] float32
    spshape = tuple(int(d) for d in sparse_dict["spshape"])
    batch_size = int(sparse_dict["batch_size"])
    n = coords.shape[0]

    # Pad rows so the LAST row is always invalid (it becomes the guaranteed
    # zero row that out-of-range / missing gathers point at).
    ncap = _round_up(n + 1, ROW_ALIGN)
    valid = jnp.arange(ncap) < n
    coords = jnp.pad(coords, ((0, ncap - n), (0, 0)))
    feats = jnp.pad(feats, ((0, ncap - n), (0, 0)))

    # mlp1
    feats = sparse_pointwise_layer(valid, feats, params["mlp1"])

    in_shape = spshape
    for conv_params, stride in params["convs"]:
        if stride == 1:
            # TODO(synk): `single_conv` source not provided; stride-1 conv is
            # implemented as a submanifold conv (output sites == input sites).
            out_coords, out_valid, out_shape = coords, valid, in_shape
        else:
            out_coords, out_valid, out_shape = _downsample_sites(
                coords, valid, stride, in_shape)
        feats = sparse_conv_layer(coords, valid, feats, out_coords, out_valid,
                                  conv_params, stride, in_shape)
        coords, valid, in_shape = out_coords, out_valid, out_shape

    # global_max_pool: SparseMaxPool3d(3) over the remaining 3x3x3 grid,
    # then .dense().view(batch_size, -1)  -> [B, 1024] -> MLP head (fused).
    assert in_shape == (3, 3, 3)
    mask = ((coords[:, 0][None, :] == jnp.arange(batch_size)[:, None])
            & valid[None, :]).astype(jnp.float32)
    return pool_mlp_head(feats, mask, params["mlp"])


if __name__ == "__main__":
    key = jax.random.PRNGKey(0)
    kp, kc, kf = jax.random.split(key, 3)

    B = 2
    # 6 stride-2 convs: 129 -> 65 -> 33 -> 17 -> 9 -> 5 -> 3, then pool(3) -> 1,
    # so flatten gives exactly embedding_channel = 1024 per batch element.
    SPSHAPE = (129, 129, 129)
    NPTS = 32                   # active voxels per batch element (small)

    coord_rows = []
    ck = jax.random.split(kc, B)
    vol = SPSHAPE[0] * SPSHAPE[1] * SPSHAPE[2]
    for b in range(B):
        lin = jax.random.permutation(ck[b], vol)[:NPTS]
        z = lin // (SPSHAPE[1] * SPSHAPE[2])
        y = (lin % (SPSHAPE[1] * SPSHAPE[2])) // SPSHAPE[2]
        x = lin % SPSHAPE[2]
        bb = jnp.full_like(z, b)
        coord_rows.append(jnp.stack([bb, z, y, x], axis=-1))
    indices = jnp.concatenate(coord_rows, axis=0).astype(jnp.int32)   # [64, 4]
    features = jax.random.normal(kf, (B * NPTS, 3), jnp.float32)

    sparse_dict = {"features": features, "indices": indices,
                   "spshape": SPSHAPE, "batch_size": B}

    params = build_network_params(kp)
    logits = network_forward(sparse_dict, params)
    logits = jax.block_until_ready(logits)
    assert logits.shape == (B, 30) and logits.dtype == jnp.float32
    print("KERNEL_OK")
</pallas_src>

<mosaic_0001>
module attributes {stable_mosaic.version = 11 : i64} {
  func.func @_spconv_matmul_kernel(%arg0: i32, %arg1: i32, %arg2: i32, %arg3: memref<256x3xbf16, #tpu.memory_space<vmem>>, %arg4: memref<3x32xbf16, #tpu.memory_space<vmem>>, %arg5: memref<1x32xf32, #tpu.memory_space<vmem>>, %arg6: memref<1x32xf32, #tpu.memory_space<vmem>>, %arg7: memref<256x1xf32, #tpu.memory_space<vmem>>, %arg8: memref<256x32xbf16, #tpu.memory_space<vmem>>, %arg9: memref<256x32xf32, #tpu.memory_space<vmem>>) attributes {dimension_semantics = [#tpu.dimension_semantics<parallel>, #tpu.dimension_semantics<parallel>, #tpu.dimension_semantics<arbitrary>], iteration_bounds = array<i64: 1, 1, 1>, scalar_prefetch = 0 : i64, scratch_operands = 1 : i64, tpu.core_type = #tpu.core_type<tc>, window_params = [{transform_indices = @transform_0, window_bounds = array<i64: 256, 3>}, {transform_indices = @transform_1, window_bounds = array<i64: 3, 32>}, {transform_indices = @transform_2, window_bounds = array<i64: 1, 32>}, {transform_indices = @transform_3, window_bounds = array<i64: 1, 32>}, {transform_indices = @transform_4, window_bounds = array<i64: 256, 1>}, {transform_indices = @transform_5, window_bounds = array<i64: 256, 32>}]} {
    %c0_i32 = arith.constant 0 : i32
    %0 = arith.cmpi eq, %arg2, %c0_i32 : i32
    %1 = arith.extui %0 : i1 to i32
    %c0_i32_0 = arith.constant 0 : i32
    %2 = arith.cmpi ne, %1, %c0_i32_0 : i32
    scf.if %2 {
      %cst_10 = arith.constant 0.000000e+00 : f32
      %12 = vector.broadcast %cst_10 : f32 to vector<256x32xf32>
      %c0_11 = arith.constant 0 : index
      %c0_12 = arith.constant 0 : index
      %13 = vector.load %arg9[%c0_11, %c0_12] : memref<256x32xf32, #tpu.memory_space<vmem>>, vector<256x32xf32>
      tpu.vector_store %arg9[%c0_11, %c0_12], %12 {strides = array<i32>} : memref<256x32xf32, #tpu.memory_space<vmem>>, vector<256x32xf32>,
    } else {
    }
    %c0 = arith.constant 0 : index
    %c0_1 = arith.constant 0 : index
    %3 = vector.load %arg9[%c0, %c0_1] : memref<256x32xf32, #tpu.memory_space<vmem>>, vector<256x32xf32>
    %c0_2 = arith.constant 0 : index
    %c0_3 = arith.constant 0 : index
    %4 = vector.load %arg3[%c0_2, %c0_3] : memref<256x3xbf16, #tpu.memory_space<vmem>>, vector<256x3xbf16>
    %c0_4 = arith.constant 0 : index
    %c0_5 = arith.constant 0 : index
    %5 = vector.load %arg4[%c0_4, %c0_5] : memref<3x32xbf16, #tpu.memory_space<vmem>>, vector<3x32xbf16>
    %cst = arith.constant dense<0.000000e+00> : vector<256x32xf32>
    %6 = tpu.matmul %4, %5, %cst {dimension_numbers = #tpu.dot_dimension_numbers<[1], [0], [0], [1], [0, 0, 1, 1], [], []>} : vector<256x3xbf16>, vector<3x32xbf16>, vector<256x32xf32> -> vector<256x32xf32>
    %7 = arith.addf %3, %6 : vector<256x32xf32>
    %c0_6 = arith.constant 0 : index
    %c0_7 = arith.constant 0 : index
    %8 = vector.load %arg9[%c0_6, %c0_7] : memref<256x32xf32, #tpu.memory_space<vmem>>, vector<256x32xf32>
    tpu.vector_store %arg9[%c0_6, %c0_7], %7 {strides = array<i32>} : memref<256x32xf32, #tpu.memory_space<vmem>>, vector<256x32xf32>,
    %c0_i32_8 = arith.constant 0 : i32
    %9 = arith.cmpi eq, %arg2, %c0_i32_8 : i32
    %10 = arith.extui %9 : i1 to i32
    %c0_i32_9 = arith.constant 0 : i32
    %11 = arith.cmpi ne, %10, %c0_i32_9 : i32
    scf.if %11 {
      %c0_10 = arith.constant 0 : index
      %c0_11 = arith.constant 0 : index
      %12 = vector.load %arg9[%c0_10, %c0_11] : memref<256x32xf32, #tpu.memory_space<vmem>>, vector<256x32xf32>
      %c0_12 = arith.constant 0 : index
      %c0_13 = arith.constant 0 : index
      %13 = vector.load %arg5[%c0_12, %c0_13] : memref<1x32xf32, #tpu.memory_space<vmem>>, vector<1x32xf32>
      %14 = vector.broadcast %13 : vector<1x32xf32> to vector<256x32xf32>
      %15 = arith.mulf %12, %14 : vector<256x32xf32>
      %c0_14 = arith.constant 0 : index
      %c0_15 = arith.constant 0 : index
      %16 = vector.load %arg6[%c0_14, %c0_15] : memref<1x32xf32, #tpu.memory_space<vmem>>, vector<1x32xf32>
      %17 = vector.broadcast %16 : vector<1x32xf32> to vector<256x32xf32>
      %18 = arith.addf %15, %17 : vector<256x32xf32>
      %cst_16 = arith.constant 0.000000e+00 : f32
      %19 = vector.broadcast %cst_16 : f32 to vector<256x32xf32>
      %20 = arith.maximumf %18, %19 : vector<256x32xf32>
      %c0_17 = arith.constant 0 : index
      %c0_18 = arith.constant 0 : index
      %21 = vector.load %arg7[%c0_17, %c0_18] : memref<256x1xf32, #tpu.memory_space<vmem>>, vector<256x1xf32>
      %22 = vector.broadcast %21 : vector<256x1xf32> to vector<256x32xf32>
      %23 = arith.mulf %20, %22 : vector<256x32xf32>
      %24 = arith.truncf %23 : vector<256x32xf32> to vector<256x32xbf16>
      %c0_19 = arith.constant 0 : index
      %c0_20 = arith.constant 0 : index
      %25 = vector.load %arg8[%c0_19, %c0_20] : memref<256x32xbf16, #tpu.memory_space<vmem>>, vector<256x32xbf16>
      tpu.vector_store %arg8[%c0_19, %c0_20], %24 {strides = array<i32>} : memref<256x32xbf16, #tpu.memory_space<vmem>>, vector<256x32xbf16>,
    } else {
    }
    return
  }
  func.func @transform_0(%arg0: i32, %arg1: i32, %arg2: i32) -> (i32, i32) {
    %c0_i32 = arith.constant 0 : i32
    return %arg0, %arg2 : i32, i32
  }
  func.func @transform_1(%arg0: i32, %arg1: i32, %arg2: i32) -> (i32, i32) {
    %c0_i32 = arith.constant 0 : i32
    return %arg2, %arg1 : i32, i32
  }
  func.func @transform_2(%arg0: i32, %arg1: i32, %arg2: i32) -> (i32, i32) {
    %c0_i32 = arith.constant 0 : i32
    %c0_i32_0 = arith.constant 0 : i32
    return %c0_i32, %arg1 : i32, i32
  }
  func.func @transform_3(%arg0: i32, %arg1: i32, %arg2: i32) -> (i32, i32) {
    %c0_i32 = arith.constant 0 : i32
    %c0_i32_0 = arith.constant 0 : i32
    return %c0_i32, %arg1 : i32, i32
  }
  func.func @transform_4(%arg0: i32, %arg1: i32, %arg2: i32) -> (i32, i32) {
    %c0_i32 = arith.constant 0 : i32
    %c0_i32_0 = arith.constant 0 : i32
    return %arg0, %c0_i32 : i32, i32
  }
  func.func @transform_5(%arg0: i32, %arg1: i32, %arg2: i32) -> (i32, i32) {
    %c0_i32 = arith.constant 0 : i32
    return %arg0, %arg1 : i32, i32
  }
}

</mosaic_0001>

<llo_original>
// kernel: tpu_custom_call.1
$region0: #{tpu_custom_call.1}
  #allocation0 [shape = 'u32[]', space=smem, size = 0x4, offset = 0x4, fixed_abs, tag = 'smem constant byte address 0x4 - core index']
  #allocation1 [shape = 'u32[72,128]{1,0:T(1,128)}', space=vmem, size = 0x9000, scoped, tag = 'internal scratch']
  #allocation2 [shape = 'f32[256,32]{1,0:T(8,128)}', space=vmem, size = 0x20000, scoped, tag = 'scratch operand']
  %s0 = inlined_call_operand.vmem [shape: bf16[256,3], index: 0, kind: input, shape index: {}]
  %s1 = inlined_call_operand.vmem [shape: bf16[3,32], index: 1, kind: input, shape index: {}]
  %s2 = inlined_call_operand.vmem [shape: f32[1,32], index: 2, kind: input, shape index: {}]
  %s3 = inlined_call_operand.vmem [shape: f32[1,32], index: 3, kind: input, shape index: {}]
  %s4 = inlined_call_operand.vmem [shape: f32[256,1], index: 4, kind: input, shape index: {}]
  %s5 = inlined_call_operand.vmem [shape: bf16[256,32], index: 5, kind: output, shape index: {}]
  %s6 = sld [smem:[#allocation0]]
  $region38: #{tpu_custom_call.1} parent=0
    _
  %s8 = ssub.s32 1, %s6
  %s9 = scalar_select 0, %s8, %s6
  // Predicated region
  $region2: #{tpu_custom_call.1} parent=0 // pred_check
    _
  $region3: #{tpu_custom_call.1} parent=0 // pred_check_branch
    %11 = sbr.rel (0) target = $region5
  $region4: #{tpu_custom_call.1} parent=0 // pred_region
    _
  $region5: #{tpu_custom_call.1} parent=0 // pred_fallthru
    _
  // Predicated region
  $region6: #{tpu_custom_call.1} parent=0 // pred_check
    _
  $region7: #{tpu_custom_call.1} parent=0 // pred_check_branch
    %13 = sbr.rel (0) target = $region9
  $region8: #{tpu_custom_call.1} parent=0 // pred_region
    _
  $region9: #{tpu_custom_call.1} parent=0 // pred_fallthru
    _
  // Predicated region
  $region10: #{tpu_custom_call.1} parent=0 // pred_check
    _
  $region11: #{tpu_custom_call.1} parent=0 // pred_check_branch
    %15 = sbr.rel (0) target = $region13
  $region12: #{tpu_custom_call.1} parent=0 // pred_region
    _
  $region13: #{tpu_custom_call.1} parent=0 // pred_fallthru
    _
  // Predicated region
  $region14: #{tpu_custom_call.1} parent=0 // pred_check
    _
  $region15: #{tpu_custom_call.1} parent=0 // pred_check_branch
    %17 = sbr.rel (0) target = $region17
  $region16: #{tpu_custom_call.1} parent=0 // pred_region
    _
  $region17: #{tpu_custom_call.1} parent=0 // pred_fallthru
    _
  // Predicated region
  $region18: #{tpu_custom_call.1} parent=0 // pred_check
    _
  $region19: #{tpu_custom_call.1} parent=0 // pred_check_branch
    %19 = sbr.rel (0) target = $region21
  $region20: #{tpu_custom_call.1} parent=0 // pred_region
    _
  $region21: #{tpu_custom_call.1} parent=0 // pred_fallthru
    _
  %p21 = scmp.eq.s32.totalorder 0, 0
  // Predicated region
  $region22: #{tpu_custom_call.1} parent=0 // pred_check
    %p22 = pneg %p21
  $region23: #{tpu_custom_call.1} parent=0 // pred_check_branch
    %24 = sbr.rel (%p22) target = $region25
  $region24: #{tpu_custom_call.1} parent=0 // pred_region
    %vm25 = vcmask 261120
    %26 = vst.msk [vmem:[#allocation2] sm:$0xff] %vm25, 0.0
    %27 = vst.msk [vmem:[#allocation2 + $0x8] sm:$0xff] %vm25, 0.0
    %28 = vst.msk [vmem:[#allocation2 + $0x10] sm:$0xff] %vm25, 0.0
    %29 = vst.msk [vmem:[#allocation2 + $0x18] sm:$0xff] %vm25, 0.0
    %30 = vst.msk [vmem:[#allocation2 + $0x20] sm:$0xff] %vm25, 0.0
    %31 = vst.msk [vmem:[#allocation2 + $0x28] sm:$0xff] %vm25, 0.0
    %32 = vst.msk [vmem:[#allocation2 + $0x30] sm:$0xff] %vm25, 0.0
    %33 = vst.msk [vmem:[#allocation2 + $0x38] sm:$0xff] %vm25, 0.0
    %34 = vst.msk [vmem:[#allocation2 + $0x40] sm:$0xff] %vm25, 0.0
    %35 = vst.msk [vmem:[#allocation2 + $0x48] sm:$0xff] %vm25, 0.0
    %36 = vst.msk [vmem:[#allocation2 + $0x50] sm:$0xff] %vm25, 0.0
    %37 = vst.msk [vmem:[#allocation2 + $0x58] sm:$0xff] %vm25, 0.0
    %38 = vst.msk [vmem:[#allocation2 + $0x60] sm:$0xff] %vm25, 0.0
    %39 = vst.msk [vmem:[#allocation2 + $0x68] sm:$0xff] %vm25, 0.0
    %40 = vst.msk [vmem:[#allocation2 + $0x70] sm:$0xff] %vm25, 0.0
    %41 = vst.msk [vmem:[#allocation2 + $0x78] sm:$0xff] %vm25, 0.0
    %42 = vst.msk [vmem:[#allocation2 + $0x80] sm:$0xff] %vm25, 0.0
    %43 = vst.msk [vmem:[#allocation2 + $0x88] sm:$0xff] %vm25, 0.0
    %44 = vst.msk [vmem:[#allocation2 + $0x90] sm:$0xff] %vm25, 0.0
    %45 = vst.msk [vmem:[#allocation2 + $0x98] sm:$0xff] %vm25, 0.0
    %46 = vst.msk [vmem:[#allocation2 + $0xa0] sm:$0xff] %vm25, 0.0
    %47 = vst.msk [vmem:[#allocation2 + $0xa8] sm:$0xff] %vm25, 0.0
    %48 = vst.msk [vmem:[#allocation2 + $0xb0] sm:$0xff] %vm25, 0.0
    %49 = vst.msk [vmem:[#allocation2 + $0xb8] sm:$0xff] %vm25, 0.0
    %50 = vst.msk [vmem:[#allocation2 + $0xc0] sm:$0xff] %vm25, 0.0
    %51 = vst.msk [vmem:[#allocation2 + $0xc8] sm:$0xff] %vm25, 0.0
    %52 = vst.msk [vmem:[#allocation2 + $0xd0] sm:$0xff] %vm25, 0.0
    %53 = vst.msk [vmem:[#allocation2 + $0xd8] sm:$0xff] %vm25, 0.0
    %54 = vst.msk [vmem:[#allocation2 + $0xe0] sm:$0xff] %vm25, 0.0
    %55 = vst.msk [vmem:[#allocation2 + $0xe8] sm:$0xff] %vm25, 0.0
    %56 = vst.msk [vmem:[#allocation2 + $0xf0] sm:$0xff] %vm25, 0.0
    %57 = vst.msk [vmem:[#allocation2 + $0xf8] sm:$0xff] %vm25, 0.0
  $region25: #{tpu_custom_call.1} parent=0 // pred_fallthru
    _
  %v58 = vld [vmem:[#allocation2] sm:$0xff]
  %v59 = vld [vmem:[#allocation2 + $0x8] sm:$0xff]
  %v60 = vld [vmem:[#allocation2 + $0x10] sm:$0xff]
  %v61 = vld [vmem:[#allocation2 + $0x18] sm:$0xff]
  %v62 = vld [vmem:[#allocation2 + $0x20] sm:$0xff]
  %v63 = vld [vmem:[#allocation2 + $0x28] sm:$0xff]
  %v64 = vld [vmem:[#allocation2 + $0x30] sm:$0xff]
  %v65 = vld [vmem:[#allocation2 + $0x38] sm:$0xff]
  %v66 = vld [vmem:[#allocation2 + $0x40] sm:$0xff]
  %v67 = vld [vmem:[#allocation2 + $0x48] sm:$0xff]
  %v68 = vld [vmem:[#allocation2 + $0x50] sm:$0xff]
  %v69 = vld [vmem:[#allocation2 + $0x58] sm:$0xff]
  %v70 = vld [vmem:[#allocation2 + $0x60] sm:$0xff]
  %v71 = vld [vmem:[#allocation2 + $0x68] sm:$0xff]
  %v72 = vld [vmem:[#allocation2 + $0x70] sm:$0xff]
  %v73 = vld [vmem:[#allocation2 + $0x78] sm:$0xff]
  %v74 = vld [vmem:[#allocation2 + $0x80] sm:$0xff]
  %v75 = vld [vmem:[#allocation2 + $0x88] sm:$0xff]
  %v76 = vld [vmem:[#allocation2 + $0x90] sm:$0xff]
  %v77 = vld [vmem:[#allocation2 + $0x98] sm:$0xff]
  %v78 = vld [vmem:[#allocation2 + $0xa0] sm:$0xff]
  %v79 = vld [vmem:[#allocation2 + $0xa8] sm:$0xff]
  %v80 = vld [vmem:[#allocation2 + $0xb0] sm:$0xff]
  %v81 = vld [vmem:[#allocation2 + $0xb8] sm:$0xff]
  %v82 = vld [vmem:[#allocation2 + $0xc0] sm:$0xff]
  %v83 = vld [vmem:[#allocation2 + $0xc8] sm:$0xff]
  %v84 = vld [vmem:[#allocation2 + $0xd0] sm:$0xff]
  %v85 = vld [vmem:[#allocation2 + $0xd8] sm:$0xff]
  %v86 = vld [vmem:[#allocation2 + $0xe0] sm:$0xff]
  %v87 = vld [vmem:[#allocation2 + $0xe8] sm:$0xff]
  %v88 = vld [vmem:[#allocation2 + $0xf0] sm:$0xff]
  %v89 = vld [vmem:[#allocation2 + $0xf8] sm:$0xff]
  %v90 = vld [vmem:[%s0] sm:$0xf]
  %v91 = vld [vmem:[%s0 + $0x4] sm:$0xf]
  %v92 = vld [vmem:[%s0 + $0x8] sm:$0xf]
  %v93 = vld [vmem:[%s0 + $0xc] sm:$0xf]
  %v94 = vld [vmem:[%s0 + $0x10] sm:$0xf]
  %v95 = vld [vmem:[%s0 + $0x14] sm:$0xf]
  %v96 = vld [vmem:[%s0 + $0x18] sm:$0xf]
  %v97 = vld [vmem:[%s0 + $0x1c] sm:$0xf]
  %v98 = vld [vmem:[%s0 + $0x20] sm:$0xf]
  %v99 = vld [vmem:[%s0 + $0x24] sm:$0xf]
  %v100 = vld [vmem:[%s0 + $0x28] sm:$0xf]
  %v101 = vld [vmem:[%s0 + $0x2c] sm:$0xf]
  %v102 = vld [vmem:[%s0 + $0x30] sm:$0xf]
  %v103 = vld [vmem:[%s0 + $0x34] sm:$0xf]
  %v104 = vld [vmem:[%s0 + $0x38] sm:$0xf]
  %v105 = vld [vmem:[%s0 + $0x3c] sm:$0xf]
  %v106 = vld [vmem:[%s0 + $0x40] sm:$0xf]
  %v107 = vld [vmem:[%s0 + $0x44] sm:$0xf]
  %v108 = vld [vmem:[%s0 + $0x48] sm:$0xf]
  %v109 = vld [vmem:[%s0 + $0x4c] sm:$0xf]
  %v110 = vld [vmem:[%s0 + $0x50] sm:$0xf]
  %v111 = vld [vmem:[%s0 + $0x54] sm:$0xf]
  %v112 = vld [vmem:[%s0 + $0x58] sm:$0xf]
  %v113 = vld [vmem:[%s0 + $0x5c] sm:$0xf]
  %v114 = vld [vmem:[%s0 + $0x60] sm:$0xf]
  %v115 = vld [vmem:[%s0 + $0x64] sm:$0xf]
  %v116 = vld [vmem:[%s0 + $0x68] sm:$0xf]
  %v117 = vld [vmem:[%s0 + $0x6c] sm:$0xf]
  %v118 = vld [vmem:[%s0 + $0x70] sm:$0xf]
  %v119 = vld [vmem:[%s0 + $0x74] sm:$0xf]
  %v120 = vld [vmem:[%s0 + $0x78] sm:$0xf]
  %v121 = vld [vmem:[%s0 + $0x7c] sm:$0xf]
  %v122 = vld [vmem:[%s1] sm:$0x3]
  %v155 = vunpack.c.l.b16 %v90
  %v156 = vunpack.c.l.b16 %v91
  %v157 = vunpack.c.l.b16 %v92
  %v158 = vunpack.c.l.b16 %v93
  %v159 = vunpack.c.l.b16 %v94
  %v160 = vunpack.c.l.b16 %v95
  %v161 = vunpack.c.l.b16 %v96
  %v162 = vunpack.c.l.b16 %v97
  %v163 = vunpack.c.l.b16 %v98
  %v164 = vunpack.c.l.b16 %v99
  %v165 = vunpack.c.l.b16 %v100
  %v166 = vunpack.c.l.b16 %v101
  %v167 = vunpack.c.l.b16 %v102
  %v168 = vunpack.c.l.b16 %v103
  %v169 = vunpack.c.l.b16 %v104
  %v170 = vunpack.c.l.b16 %v105
  %v171 = vunpack.c.l.b16 %v106
  %v172 = vunpack.c.l.b16 %v107
  %v173 = vunpack.c.l.b16 %v108
  %v174 = vunpack.c.l.b16 %v109
  %v175 = vunpack.c.l.b16 %v110
  %v176 = vunpack.c.l.b16 %v111
  %v177 = vunpack.c.l.b16 %v112
  %v178 = vunpack.c.l.b16 %v113
  %v179 = vunpack.c.l.b16 %v114
  %v180 = vunpack.c.l.b16 %v115
  %v181 = vunpack.c.l.b16 %v116
  %v182 = vunpack.c.l.b16 %v117
  %v183 = vunpack.c.l.b16 %v118
  %v184 = vunpack.c.l.b16 %v119
  %v185 = vunpack.c.l.b16 %v120
  %v186 = vunpack.c.l.b16 %v121
  %v187 = vpack.c.b16 %v156, %v155
  %v188 = vpack.c.b16 %v158, %v157
  %v189 = vpack.c.b16 %v160, %v159
  %v190 = vpack.c.b16 %v162, %v161
  %v191 = vpack.c.b16 %v164, %v163
  %v192 = vpack.c.b16 %v166, %v165
  %v193 = vpack.c.b16 %v168, %v167
  %v194 = vpack.c.b16 %v170, %v169
  %v195 = vpack.c.b16 %v172, %v171
  %v196 = vpack.c.b16 %v174, %v173
  %v197 = vpack.c.b16 %v176, %v175
  %v198 = vpack.c.b16 %v178, %v177
  %v199 = vpack.c.b16 %v180, %v179
  %v200 = vpack.c.b16 %v182, %v181
  %v201 = vpack.c.b16 %v184, %v183
  %v202 = vpack.c.b16 %v186, %v185
  %vm203 = vcmask 23552
  %v205 = vsel %vm203, %v187, 0
  %v208 = vsel %vm203, %v188, 0
  %v211 = vsel %vm203, %v189, 0
  %v214 = vsel %vm203, %v190, 0
  %v217 = vsel %vm203, %v191, 0
  %v220 = vsel %vm203, %v192, 0
  %v223 = vsel %vm203, %v193, 0
  %v226 = vsel %vm203, %v194, 0
  %v229 = vsel %vm203, %v195, 0
  %v232 = vsel %vm203, %v196, 0
  %v235 = vsel %vm203, %v197, 0
  %v238 = vsel %vm203, %v198, 0
  %v241 = vsel %vm203, %v199, 0
  %v244 = vsel %vm203, %v200, 0
  %v247 = vsel %vm203, %v201, 0
  %v250 = vsel %vm203, %v202, 0
  %vm252 = vcmask 1040384
  %vm253 = vcmask 1041408
  %v254 = vsel %vm252, 4294967295, 65535
  %v255 = vsel %vm253, %v254, 0
  %v257 = vand.u32 %v122, %v255
  %259 = vmatpush.bf16.msra.mxu0 0
  %260 = vmatpush.bf16.msra.mxu0 0
  %261 = vmatpush.bf16.msra.mxu0 0
  %262 = vmatpush.bf16.msra.mxu0 0
  %263 = vmatpush.bf16.msra.mxu0 0
  %264 = vmatpush.bf16.msra.mxu0 0
  %265 = vmatpush.bf16.msra.mxu0 0
  %266 = vmatpush.bf16.msra.mxu0 %v257
  %267 = vmatmul.bf16.gmra.mxu0 %v205
  %v268 = vpop.f32.mrf.mxu0
  %v269 = vadd.f32 0.0, %v268
  %v270 = vpop.f32.mrf.mxu0
  %v271 = vadd.f32 0.0, %v270
  %272 = vmatmul.bf16.gmra.mxu0 %v208
  %v273 = vpop.f32.mrf.mxu0
  %v274 = vadd.f32 0.0, %v273
  %v275 = vpop.f32.mrf.mxu0
  %v276 = vadd.f32 0.0, %v275
  %277 = vmatmul.bf16.gmra.mxu0 %v211
  %v278 = vpop.f32.mrf.mxu0
  %v279 = vadd.f32 0.0, %v278
  %v280 = vpop.f32.mrf.mxu0
  %v281 = vadd.f32 0.0, %v280
  %282 = vmatmul.bf16.gmra.mxu0 %v214
  %v283 = vpop.f32.mrf.mxu0
  %v284 = vadd.f32 0.0, %v283
  %v285 = vpop.f32.mrf.mxu0
  %v286 = vadd.f32 0.0, %v285
  %287 = vmatmul.bf16.gmra.mxu0 %v217
  %v288 = vpop.f32.mrf.mxu0
  %v289 = vadd.f32 0.0, %v288
  %v290 = vpop.f32.mrf.mxu0
  %v291 = vadd.f32 0.0, %v290
  %292 = vmatmul.bf16.gmra.mxu0 %v220
  %v293 = vpop.f32.mrf.mxu0
  %v294 = vadd.f32 0.0, %v293
  %v295 = vpop.f32.mrf.mxu0
  %v296 = vadd.f32 0.0, %v295
  %297 = vmatmul.bf16.gmra.mxu0 %v223
  %v298 = vpop.f32.mrf.mxu0
  %v299 = vadd.f32 0.0, %v298
  %v300 = vpop.f32.mrf.mxu0
  %v301 = vadd.f32 0.0, %v300
  %302 = vmatmul.bf16.gmra.mxu0 %v226
  %v303 = vpop.f32.mrf.mxu0
  %v304 = vadd.f32 0.0, %v303
  %v305 = vpop.f32.mrf.mxu0
  %v306 = vadd.f32 0.0, %v305
  %307 = vmatmul.bf16.gmra.mxu0 %v229
  %v308 = vpop.f32.mrf.mxu0
  %v309 = vadd.f32 0.0, %v308
  %v310 = vpop.f32.mrf.mxu0
  %v311 = vadd.f32 0.0, %v310
  %312 = vmatmul.bf16.gmra.mxu0 %v232
  %v313 = vpop.f32.mrf.mxu0
  %v314 = vadd.f32 0.0, %v313
  %v315 = vpop.f32.mrf.mxu0
  %v316 = vadd.f32 0.0, %v315
  %317 = vmatmul.bf16.gmra.mxu0 %v235
  %v318 = vpop.f32.mrf.mxu0
  %v319 = vadd.f32 0.0, %v318
  %v320 = vpop.f32.mrf.mxu0
  %v321 = vadd.f32 0.0, %v320
  %322 = vmatmul.bf16.gmra.mxu0 %v238
  %v323 = vpop.f32.mrf.mxu0
  %v324 = vadd.f32 0.0, %v323
  %v325 = vpop.f32.mrf.mxu0
  %v326 = vadd.f32 0.0, %v325
  %327 = vmatmul.bf16.gmra.mxu0 %v241
  %v328 = vpop.f32.mrf.mxu0
  %v329 = vadd.f32 0.0, %v328
  %v330 = vpop.f32.mrf.mxu0
  %v331 = vadd.f32 0.0, %v330
  %332 = vmatmul.bf16.gmra.mxu0 %v244
  %v333 = vpop.f32.mrf.mxu0
  %v334 = vadd.f32 0.0, %v333
  %v335 = vpop.f32.mrf.mxu0
  %v336 = vadd.f32 0.0, %v335
  %337 = vmatmul.bf16.gmra.mxu0 %v247
  %v338 = vpop.f32.mrf.mxu0
  %v339 = vadd.f32 0.0, %v338
  %v340 = vpop.f32.mrf.mxu0
  %v341 = vadd.f32 0.0, %v340
  %342 = vmatmul.bf16.gmra.mxu0 %v250
  %v343 = vpop.f32.mrf.mxu0
  %v344 = vadd.f32 0.0, %v343
  %v345 = vpop.f32.mrf.mxu0
  %v346 = vadd.f32 0.0, %v345
  %347 = vdwg.mxu0
  %v348 = vadd.f32 %v58, %v269
  %v349 = vadd.f32 %v59, %v271
  %v350 = vadd.f32 %v60, %v274
  %v351 = vadd.f32 %v61, %v276
  %v352 = vadd.f32 %v62, %v279
  %v353 = vadd.f32 %v63, %v281
  %v354 = vadd.f32 %v64, %v284
  %v355 = vadd.f32 %v65, %v286
  %v356 = vadd.f32 %v66, %v289
  %v357 = vadd.f32 %v67, %v291
  %v358 = vadd.f32 %v68, %v294
  %v359 = vadd.f32 %v69, %v296
  %v360 = vadd.f32 %v70, %v299
  %v361 = vadd.f32 %v71, %v301
  %v362 = vadd.f32 %v72, %v304
  %v363 = vadd.f32 %v73, %v306
  %v364 = vadd.f32 %v74, %v309
  %v365 = vadd.f32 %v75, %v311
  %v366 = vadd.f32 %v76, %v314
  %v367 = vadd.f32 %v77, %v316
  %v368 = vadd.f32 %v78, %v319
  %v369 = vadd.f32 %v79, %v321
  %v370 = vadd.f32 %v80, %v324
  %v371 = vadd.f32 %v81, %v326
  %v372 = vadd.f32 %v82, %v329
  %v373 = vadd.f32 %v83, %v331
  %v374 = vadd.f32 %v84, %v334
  %v375 = vadd.f32 %v85, %v336
  %v376 = vadd.f32 %v86, %v339
  %v377 = vadd.f32 %v87, %v341
  %v378 = vadd.f32 %v88, %v344
  %v379 = vadd.f32 %v89, %v346
  %vm380 = vcmask 261120
  %381 = vst.msk [vmem:[#allocation2] sm:$0xff] %vm380, %v348
  %382 = vst.msk [vmem:[#allocation2 + $0x8] sm:$0xff] %vm380, %v349
  %383 = vst.msk [vmem:[#allocation2 + $0x10] sm:$0xff] %vm380, %v350
  %384 = vst.msk [vmem:[#allocation2 + $0x18] sm:$0xff] %vm380, %v351
  %385 = vst.msk [vmem:[#allocation2 + $0x20] sm:$0xff] %vm380, %v352
  %386 = vst.msk [vmem:[#allocation2 + $0x28] sm:$0xff] %vm380, %v353
  %387 = vst.msk [vmem:[#allocation2 + $0x30] sm:$0xff] %vm380, %v354
  %388 = vst.msk [vmem:[#allocation2 + $0x38] sm:$0xff] %vm380, %v355
  %389 = vst.msk [vmem:[#allocation2 + $0x40] sm:$0xff] %vm380, %v356
  %390 = vst.msk [vmem:[#allocation2 + $0x48] sm:$0xff] %vm380, %v357
  %391 = vst.msk [vmem:[#allocation2 + $0x50] sm:$0xff] %vm380, %v358
  %392 = vst.msk [vmem:[#allocation2 + $0x58] sm:$0xff] %vm380, %v359
  %393 = vst.msk [vmem:[#allocation2 + $0x60] sm:$0xff] %vm380, %v360
  %394 = vst.msk [vmem:[#allocation2 + $0x68] sm:$0xff] %vm380, %v361
  %395 = vst.msk [vmem:[#allocation2 + $0x70] sm:$0xff] %vm380, %v362
  %396 = vst.msk [vmem:[#allocation2 + $0x78] sm:$0xff] %vm380, %v363
  %397 = vst.msk [vmem:[#allocation2 + $0x80] sm:$0xff] %vm380, %v364
  %398 = vst.msk [vmem:[#allocation2 + $0x88] sm:$0xff] %vm380, %v365
  %399 = vst.msk [vmem:[#allocation2 + $0x90] sm:$0xff] %vm380, %v366
  %400 = vst.msk [vmem:[#allocation2 + $0x98] sm:$0xff] %vm380, %v367
  %401 = vst.msk [vmem:[#allocation2 + $0xa0] sm:$0xff] %vm380, %v368
  %402 = vst.msk [vmem:[#allocation2 + $0xa8] sm:$0xff] %vm380, %v369
  %403 = vst.msk [vmem:[#allocation2 + $0xb0] sm:$0xff] %vm380, %v370
  %404 = vst.msk [vmem:[#allocation2 + $0xb8] sm:$0xff] %vm380, %v371
  %405 = vst.msk [vmem:[#allocation2 + $0xc0] sm:$0xff] %vm380, %v372
  %406 = vst.msk [vmem:[#allocation2 + $0xc8] sm:$0xff] %vm380, %v373
  %407 = vst.msk [vmem:[#allocation2 + $0xd0] sm:$0xff] %vm380, %v374
  %408 = vst.msk [vmem:[#allocation2 + $0xd8] sm:$0xff] %vm380, %v375
  %409 = vst.msk [vmem:[#allocation2 + $0xe0] sm:$0xff] %vm380, %v376
  %410 = vst.msk [vmem:[#allocation2 + $0xe8] sm:$0xff] %vm380, %v377
  %411 = vst.msk [vmem:[#allocation2 + $0xf0] sm:$0xff] %vm380, %v378
  %412 = vst.msk [vmem:[#allocation2 + $0xf8] sm:$0xff] %vm380, %v379
  // Predicated region
  $region26: #{tpu_custom_call.1} parent=0 // pred_check
    %p413 = pneg %p21
  $region27: #{tpu_custom_call.1} parent=0 // pred_check_branch
    %415 = sbr.rel (%p413) target = $region29
  $region28: #{tpu_custom_call.1} parent=0 // pred_region
    %v416 = vld [vmem:[#allocation2] sm:$0xff]
    %v417 = vld [vmem:[#allocation2 + $0x8] sm:$0xff]
    %v418 = vld [vmem:[#allocation2 + $0x10] sm:$0xff]
    %v419 = vld [vmem:[#allocation2 + $0x18] sm:$0xff]
    %v420 = vld [vmem:[#allocation2 + $0x20] sm:$0xff]
    %v421 = vld [vmem:[#allocation2 + $0x28] sm:$0xff]
    %v422 = vld [vmem:[#allocation2 + $0x30] sm:$0xff]
    %v423 = vld [vmem:[#allocation2 + $0x38] sm:$0xff]
    %v424 = vld [vmem:[#allocation2 + $0x40] sm:$0xff]
    %v425 = vld [vmem:[#allocation2 + $0x48] sm:$0xff]
    %v426 = vld [vmem:[#allocation2 + $0x50] sm:$0xff]
    %v427 = vld [vmem:[#allocation2 + $0x58] sm:$0xff]
    %v428 = vld [vmem:[#allocation2 + $0x60] sm:$0xff]
    %v429 = vld [vmem:[#allocation2 + $0x68] sm:$0xff]
    %v430 = vld [vmem:[#allocation2 + $0x70] sm:$0xff]
    %v431 = vld [vmem:[#allocation2 + $0x78] sm:$0xff]
    %v432 = vld [vmem:[#allocation2 + $0x80] sm:$0xff]
    %v433 = vld [vmem:[#allocation2 + $0x88] sm:$0xff]
    %v434 = vld [vmem:[#allocation2 + $0x90] sm:$0xff]
    %v435 = vld [vmem:[#allocation2 + $0x98] sm:$0xff]
    %v436 = vld [vmem:[#allocation2 + $0xa0] sm:$0xff]
    %v437 = vld [vmem:[#allocation2 + $0xa8] sm:$0xff]
    %v438 = vld [vmem:[#allocation2 + $0xb0] sm:$0xff]
    %v439 = vld [vmem:[#allocation2 + $0xb8] sm:$0xff]
    %v440 = vld [vmem:[#allocation2 + $0xc0] sm:$0xff]
    %v441 = vld [vmem:[#allocation2 + $0xc8] sm:$0xff]
    %v442 = vld [vmem:[#allocation2 + $0xd0] sm:$0xff]
    %v443 = vld [vmem:[#allocation2 + $0xd8] sm:$0xff]
    %v444 = vld [vmem:[#allocation2 + $0xe0] sm:$0xff]
    %v445 = vld [vmem:[#allocation2 + $0xe8] sm:$0xff]
    %v446 = vld [vmem:[#allocation2 + $0xf0] sm:$0xff]
    %v447 = vld [vmem:[#allocation2 + $0xf8] sm:$0xff]
    %v448 = vld [vmem:[%s2] sm:$0x1]
    %v450 = vperm.slane %v448, 0
    %v452 = vmul.f32 %v416, %v450
    %v453 = vmul.f32 %v417, %v450
    %v454 = vmul.f32 %v418, %v450
    %v455 = vmul.f32 %v419, %v450
    %v456 = vmul.f32 %v420, %v450
    %v457 = vmul.f32 %v421, %v450
    %v458 = vmul.f32 %v422, %v450
    %v459 = vmul.f32 %v423, %v450
    %v460 = vmul.f32 %v424, %v450
    %v461 = vmul.f32 %v425, %v450
    %v462 = vmul.f32 %v426, %v450
    %v463 = vmul.f32 %v427, %v450
    %v464 = vmul.f32 %v428, %v450
    %v465 = vmul.f32 %v429, %v450
    %v466 = vmul.f32 %v430, %v450
    %v467 = vmul.f32 %v431, %v450
    %v468 = vmul.f32 %v432, %v450
    %v469 = vmul.f32 %v433, %v450
    %v470 = vmul.f32 %v434, %v450
    %v471 = vmul.f32 %v435, %v450
    %v472 = vmul.f32 %v436, %v450
    %v473 = vmul.f32 %v437, %v450
    %v474 = vmul.f32 %v438, %v450
    %v475 = vmul.f32 %v439, %v450
    %v476 = vmul.f32 %v440, %v450
    %v477 = vmul.f32 %v441, %v450
    %v478 = vmul.f32 %v442, %v450
    %v479 = vmul.f32 %v443, %v450
    %v480 = vmul.f32 %v444, %v450
    %v481 = vmul.f32 %v445, %v450
    %v482 = vmul.f32 %v446, %v450
    %v483 = vmul.f32 %v447, %v450
    %v484 = vld [vmem:[%s3] sm:$0x1]
    %v486 = vperm.slane %v484, 0
    %v488 = vadd.f32 %v452, %v486
    %v489 = vadd.f32 %v453, %v486
    %v490 = vadd.f32 %v454, %v486
    %v491 = vadd.f32 %v455, %v486
    %v492 = vadd.f32 %v456, %v486
    %v493 = vadd.f32 %v457, %v486
    %v494 = vadd.f32 %v458, %v486
    %v495 = vadd.f32 %v459, %v486
    %v496 = vadd.f32 %v460, %v486
    %v497 = vadd.f32 %v461, %v486
    %v498 = vadd.f32 %v462, %v486
    %v499 = vadd.f32 %v463, %v486
    %v500 = vadd.f32 %v464, %v486
    %v501 = vadd.f32 %v465, %v486
    %v502 = vadd.f32 %v466, %v486
    %v503 = vadd.f32 %v467, %v486
    %v504 = vadd.f32 %v468, %v486
    %v505 = vadd.f32 %v469, %v486
    %v506 = vadd.f32 %v470, %v486
    %v507 = vadd.f32 %v471, %v486
    %v508 = vadd.f32 %v472, %v486
    %v509 = vadd.f32 %v473, %v486
    %v510 = vadd.f32 %v474, %v486
    %v511 = vadd.f32 %v475, %v486
    %v512 = vadd.f32 %v476, %v486
    %v513 = vadd.f32 %v477, %v486
    %v514 = vadd.f32 %v478, %v486
    %v515 = vadd.f32 %v479, %v486
    %v516 = vadd.f32 %v480, %v486
    %v517 = vadd.f32 %v481, %v486
    %v518 = vadd.f32 %v482, %v486
    %v519 = vadd.f32 %v483, %v486
    %v520 = vmax.f32 %v488, 0.0
    %v521 = vmax.f32 %v489, 0.0
    %v522 = vmax.f32 %v490, 0.0
    %v523 = vmax.f32 %v491, 0.0
    %v524 = vmax.f32 %v492, 0.0
    %v525 = vmax.f32 %v493, 0.0
    %v526 = vmax.f32 %v494, 0.0
    %v527 = vmax.f32 %v495, 0.0
    %v528 = vmax.f32 %v496, 0.0
    %v529 = vmax.f32 %v497, 0.0
    %v530 = vmax.f32 %v498, 0.0
    %v531 = vmax.f32 %v499, 0.0
    %v532 = vmax.f32 %v500, 0.0
    %v533 = vmax.f32 %v501, 0.0
    %v534 = vmax.f32 %v502, 0.0
    %v535 = vmax.f32 %v503, 0.0
    %v536 = vmax.f32 %v504, 0.0
    %v537 = vmax.f32 %v505, 0.0
    %v538 = vmax.f32 %v506, 0.0
    %v539 = vmax.f32 %v507, 0.0
    %v540 = vmax.f32 %v508, 0.0
    %v541 = vmax.f32 %v509, 0.0
    %v542 = vmax.f32 %v510, 0.0
    %v543 = vmax.f32 %v511, 0.0
    %v544 = vmax.f32 %v512, 0.0
    %v545 = vmax.f32 %v513, 0.0
    %v546 = vmax.f32 %v514, 0.0
    %v547 = vmax.f32 %v515, 0.0
    %v548 = vmax.f32 %v516, 0.0
    %v549 = vmax.f32 %v517, 0.0
    %v550 = vmax.f32 %v518, 0.0
    %v551 = vmax.f32 %v519, 0.0
    %v552 = vld [vmem:[%s4] sm:$0xff]
    %v553 = vld [vmem:[%s4 + $0x8] sm:$0xff]
    %v554 = vld [vmem:[%s4 + $0x10] sm:$0xff]
    %v555 = vld [vmem:[%s4 + $0x18] sm:$0xff]
    %v556 = vld [vmem:[%s4 + $0x20] sm:$0xff]
    %v557 = vld [vmem:[%s4 + $0x28] sm:$0xff]
    %v558 = vld [vmem:[%s4 + $0x30] sm:$0xff]
    %v559 = vld [vmem:[%s4 + $0x38] sm:$0xff]
    %v560 = vld [vmem:[%s4 + $0x40] sm:$0xff]
    %v561 = vld [vmem:[%s4 + $0x48] sm:$0xff]
    %v562 = vld [vmem:[%s4 + $0x50] sm:$0xff]
    %v563 = vld [vmem:[%s4 + $0x58] sm:$0xff]
    %v564 = vld [vmem:[%s4 + $0x60] sm:$0xff]
    %v565 = vld [vmem:[%s4 + $0x68] sm:$0xff]
    %v566 = vld [vmem:[%s4 + $0x70] sm:$0xff]
    %v567 = vld [vmem:[%s4 + $0x78] sm:$0xff]
    %v568 = vld [vmem:[%s4 + $0x80] sm:$0xff]
    %v569 = vld [vmem:[%s4 + $0x88] sm:$0xff]
    %v570 = vld [vmem:[%s4 + $0x90] sm:$0xff]
    %v571 = vld [vmem:[%s4 + $0x98] sm:$0xff]
    %v572 = vld [vmem:[%s4 + $0xa0] sm:$0xff]
    %v573 = vld [vmem:[%s4 + $0xa8] sm:$0xff]
    %v574 = vld [vmem:[%s4 + $0xb0] sm:$0xff]
    %v575 = vld [vmem:[%s4 + $0xb8] sm:$0xff]
    %v576 = vld [vmem:[%s4 + $0xc0] sm:$0xff]
    %v577 = vld [vmem:[%s4 + $0xc8] sm:$0xff]
    %v578 = vld [vmem:[%s4 + $0xd0] sm:$0xff]
    %v579 = vld [vmem:[%s4 + $0xd8] sm:$0xff]
    %v580 = vld [vmem:[%s4 + $0xe0] sm:$0xff]
    %v581 = vld [vmem:[%s4 + $0xe8] sm:$0xff]
    %v582 = vld [vmem:[%s4 + $0xf0] sm:$0xff]
    %v583 = vld [vmem:[%s4 + $0xf8] sm:$0xff]
    %585 = vset.pattern.permute.xlu0 0
    %586 = vperm.xlu0 %585, %v552
    %v587 = vpop.permute.xlu0 %586
    %590 = vset.pattern.permute.xlu0 0
    %591 = vperm.xlu0 %590, %v553
    %v592 = vpop.permute.xlu0 %591
    %595 = vset.pattern.permute.xlu0 0
    %596 = vperm.xlu0 %595, %v554
    %v597 = vpop.permute.xlu0 %596
    %600 = vset.pattern.permute.xlu0 0
    %601 = vperm.xlu0 %600, %v555
    %v602 = vpop.permute.xlu0 %601
    %605 = vset.pattern.permute.xlu0 0
    %606 = vperm.xlu0 %605, %v556
    %v607 = vpop.permute.xlu0 %606
    %610 = vset.pattern.permute.xlu0 0
    %611 = vperm.xlu0 %610, %v557
    %v612 = vpop.permute.xlu0 %611
    %615 = vset.pattern.permute.xlu0 0
    %616 = vperm.xlu0 %615, %v558
    %v617 = vpop.permute.xlu0 %616
    %620 = vset.pattern.permute.xlu0 0
    %621 = vperm.xlu0 %620, %v559
    %v622 = vpop.permute.xlu0 %621
    %625 = vset.pattern.permute.xlu0 0
    %626 = vperm.xlu0 %625, %v560
    %v627 = vpop.permute.xlu0 %626
    %630 = vset.pattern.permute.xlu0 0
    %631 = vperm.xlu0 %630, %v561
    %v632 = vpop.permute.xlu0 %631
    %635 = vset.pattern.permute.xlu0 0
    %636 = vperm.xlu0 %635, %v562
    %v637 = vpop.permute.xlu0 %636
    %640 = vset.pattern.permute.xlu0 0
    %641 = vperm.xlu0 %640, %v563
    %v642 = vpop.permute.xlu0 %641
    %645 = vset.pattern.permute.xlu0 0
    %646 = vperm.xlu0 %645, %v564
    %v647 = vpop.permute.xlu0 %646
    %650 = vset.pattern.permute.xlu0 0
    %651 = vperm.xlu0 %650, %v565
    %v652 = vpop.permute.xlu0 %651
    %655 = vset.pattern.permute.xlu0 0
    %656 = vperm.xlu0 %655, %v566
    %v657 = vpop.permute.xlu0 %656
    %660 = vset.pattern.permute.xlu0 0
    %661 = vperm.xlu0 %660, %v567
    %v662 = vpop.permute.xlu0 %661
    %665 = vset.pattern.permute.xlu0 0
    %666 = vperm.xlu0 %665, %v568
    %v667 = vpop.permute.xlu0 %666
    %670 = vset.pattern.permute.xlu0 0
    %671 = vperm.xlu0 %670, %v569
    %v672 = vpop.permute.xlu0 %671
    %675 = vset.pattern.permute.xlu0 0
    %676 = vperm.xlu0 %675, %v570
    %v677 = vpop.permute.xlu0 %676
    %680 = vset.pattern.permute.xlu0 0
    %681 = vperm.xlu0 %680, %v571
    %v682 = vpop.permute.xlu0 %681
    %685 = vset.pattern.permute.xlu0 0
    %686 = vperm.xlu0 %685, %v572
    %v687 = vpop.permute.xlu0 %686
    %690 = vset.pattern.permute.xlu0 0
    %691 = vperm.xlu0 %690, %v573
    %v692 = vpop.permute.xlu0 %691
    %695 = vset.pattern.permute.xlu0 0
    %696 = vperm.xlu0 %695, %v574
    %v697 = vpop.permute.xlu0 %696
    %700 = vset.pattern.permute.xlu0 0
    %701 = vperm.xlu0 %700, %v575
    %v702 = vpop.permute.xlu0 %701
    %705 = vset.pattern.permute.xlu0 0
    %706 = vperm.xlu0 %705, %v576
    %v707 = vpop.permute.xlu0 %706
    %710 = vset.pattern.permute.xlu0 0
    %711 = vperm.xlu0 %710, %v577
    %v712 = vpop.permute.xlu0 %711
    %715 = vset.pattern.permute.xlu0 0
    %716 = vperm.xlu0 %715, %v578
    %v717 = vpop.permute.xlu0 %716
    %720 = vset.pattern.permute.xlu0 0
    %721 = vperm.xlu0 %720, %v579
    %v722 = vpop.permute.xlu0 %721
    %725 = vset.pattern.permute.xlu0 0
    %726 = vperm.xlu0 %725, %v580
    %v727 = vpop.permute.xlu0 %726
    %730 = vset.pattern.permute.xlu0 0
    %731 = vperm.xlu0 %730, %v581
    %v732 = vpop.permute.xlu0 %731
    %735 = vset.pattern.permute.xlu0 0
    %736 = vperm.xlu0 %735, %v582
    %v737 = vpop.permute.xlu0 %736
    %740 = vset.pattern.permute.xlu0 0
    %741 = vperm.xlu0 %740, %v583
    %v742 = vpop.permute.xlu0 %741
    %v744 = vmul.f32 %v520, %v587
    %v745 = vmul.f32 %v521, %v592
    %v746 = vmul.f32 %v522, %v597
    %v747 = vmul.f32 %v523, %v602
    %v748 = vmul.f32 %v524, %v607
    %v749 = vmul.f32 %v525, %v612
    %v750 = vmul.f32 %v526, %v617
    %v751 = vmul.f32 %v527, %v622
    %v752 = vmul.f32 %v528, %v627
    %v753 = vmul.f32 %v529, %v632
    %v754 = vmul.f32 %v530, %v637
    %v755 = vmul.f32 %v531, %v642
    %v756 = vmul.f32 %v532, %v647
    %v757 = vmul.f32 %v533, %v652
    %v758 = vmul.f32 %v534, %v657
    %v759 = vmul.f32 %v535, %v662
    %v760 = vmul.f32 %v536, %v667
    %v761 = vmul.f32 %v537, %v672
    %v762 = vmul.f32 %v538, %v677
    %v763 = vmul.f32 %v539, %v682
    %v764 = vmul.f32 %v540, %v687
    %v765 = vmul.f32 %v541, %v692
    %v766 = vmul.f32 %v542, %v697
    %v767 = vmul.f32 %v543, %v702
    %v768 = vmul.f32 %v544, %v707
    %v769 = vmul.f32 %v545, %v712
    %v770 = vmul.f32 %v546, %v717
    %v771 = vmul.f32 %v547, %v722
    %v772 = vmul.f32 %v548, %v727
    %v773 = vmul.f32 %v549, %v732
    %v774 = vmul.f32 %v550, %v737
    %v775 = vmul.f32 %v551, %v742
    %v776 = vpack.c.bf16 %v744, %v744
    %v777 = vpack.c.bf16 %v745, %v745
    %v778 = vpack.c.bf16 %v746, %v746
    %v779 = vpack.c.bf16 %v747, %v747
    %v780 = vpack.c.bf16 %v748, %v748
    %v781 = vpack.c.bf16 %v749, %v749
    %v782 = vpack.c.bf16 %v750, %v750
    %v783 = vpack.c.bf16 %v751, %v751
    %v784 = vpack.c.bf16 %v752, %v752
    %v785 = vpack.c.bf16 %v753, %v753
    %v786 = vpack.c.bf16 %v754, %v754
    %v787 = vpack.c.bf16 %v755, %v755
    %v788 = vpack.c.bf16 %v756, %v756
    %v789 = vpack.c.bf16 %v757, %v757
    %v790 = vpack.c.bf16 %v758, %v758
    %v791 = vpack.c.bf16 %v759, %v759
    %v792 = vpack.c.bf16 %v760, %v760
    %v793 = vpack.c.bf16 %v761, %v761
    %v794 = vpack.c.bf16 %v762, %v762
    %v795 = vpack.c.bf16 %v763, %v763
    %v796 = vpack.c.bf16 %v764, %v764
    %v797 = vpack.c.bf16 %v765, %v765
    %v798 = vpack.c.bf16 %v766, %v766
    %v799 = vpack.c.bf16 %v767, %v767
    %v800 = vpack.c.bf16 %v768, %v768
    %v801 = vpack.c.bf16 %v769, %v769
    %v802 = vpack.c.bf16 %v770, %v770
    %v803 = vpack.c.bf16 %v771, %v771
    %v804 = vpack.c.bf16 %v772, %v772
    %v805 = vpack.c.bf16 %v773, %v773
    %v806 = vpack.c.bf16 %v774, %v774
    %v807 = vpack.c.bf16 %v775, %v775
    %vm808 = vcmask 257024
    %809 = vst.msk [vmem:[%s5] sm:$0xf] %vm808, %v776
    %810 = vst.msk [vmem:[%s5 + $0x4] sm:$0xf] %vm808, %v777
    %811 = vst.msk [vmem:[%s5 + $0x8] sm:$0xf] %vm808, %v778
    %812 = vst.msk [vmem:[%s5 + $0xc] sm:$0xf] %vm808, %v779
    %813 = vst.msk [vmem:[%s5 + $0x10] sm:$0xf] %vm808, %v780
    %814 = vst.msk [vmem:[%s5 + $0x14] sm:$0xf] %vm808, %v781
    %815 = vst.msk [vmem:[%s5 + $0x18] sm:$0xf] %vm808, %v782
    %816 = vst.msk [vmem:[%s5 + $0x1c] sm:$0xf] %vm808, %v783
    %817 = vst.msk [vmem:[%s5 + $0x20] sm:$0xf] %vm808, %v784
    %818 = vst.msk [vmem:[%s5 + $0x24] sm:$0xf] %vm808, %v785
    %819 = vst.msk [vmem:[%s5 + $0x28] sm:$0xf] %vm808, %v786
    %820 = vst.msk [vmem:[%s5 + $0x2c] sm:$0xf] %vm808, %v787
    %821 = vst.msk [vmem:[%s5 + $0x30] sm:$0xf] %vm808, %v788
    %822 = vst.msk [vmem:[%s5 + $0x34] sm:$0xf] %vm808, %v789
    %823 = vst.msk [vmem:[%s5 + $0x38] sm:$0xf] %vm808, %v790
    %824 = vst.msk [vmem:[%s5 + $0x3c] sm:$0xf] %vm808, %v791
    %825 = vst.msk [vmem:[%s5 + $0x40] sm:$0xf] %vm808, %v792
    %826 = vst.msk [vmem:[%s5 + $0x44] sm:$0xf] %vm808, %v793
    %827 = vst.msk [vmem:[%s5 + $0x48] sm:$0xf] %vm808, %v794
    %828 = vst.msk [vmem:[%s5 + $0x4c] sm:$0xf] %vm808, %v795
    %829 = vst.msk [vmem:[%s5 + $0x50] sm:$0xf] %vm808, %v796
    %830 = vst.msk [vmem:[%s5 + $0x54] sm:$0xf] %vm808, %v797
    %831 = vst.msk [vmem:[%s5 + $0x58] sm:$0xf] %vm808, %v798
    %832 = vst.msk [vmem:[%s5 + $0x5c] sm:$0xf] %vm808, %v799
    %833 = vst.msk [vmem:[%s5 + $0x60] sm:$0xf] %vm808, %v800
    %834 = vst.msk [vmem:[%s5 + $0x64] sm:$0xf] %vm808, %v801
    %835 = vst.msk [vmem:[%s5 + $0x68] sm:$0xf] %vm808, %v802
    %836 = vst.msk [vmem:[%s5 + $0x6c] sm:$0xf] %vm808, %v803
    %837 = vst.msk [vmem:[%s5 + $0x70] sm:$0xf] %vm808, %v804
    %838 = vst.msk [vmem:[%s5 + $0x74] sm:$0xf] %vm808, %v805
    %839 = vst.msk [vmem:[%s5 + $0x78] sm:$0xf] %vm808, %v806
    %840 = vst.msk [vmem:[%s5 + $0x7c] sm:$0xf] %vm808, %v807
  $region29: #{tpu_custom_call.1} parent=0 // pred_fallthru
    _
  // Predicated region
  $region30: #{tpu_custom_call.1} parent=0 // pred_check
    _
  $region31: #{tpu_custom_call.1} parent=0 // pred_check_branch
    %842 = sbr.rel (0) target = $region33
  $region32: #{tpu_custom_call.1} parent=0 // pred_region
    _
  $region33: #{tpu_custom_call.1} parent=0 // pred_fallthru
    _
  // Predicated region
  $region34: #{tpu_custom_call.1} parent=0 // pred_check
    _
  $region35: #{tpu_custom_call.1} parent=0 // pred_check_branch
    %844 = sbr.rel (0) target = $region37
  $region36: #{tpu_custom_call.1} parent=0 // pred_region
    _
  $region37: #{tpu_custom_call.1} parent=0 // pred_fallthru
    _

</llo_original>
